<compile_context>
chip_gen: v7x
topology: tpu7x:2x2x1
jax: 0.10.0
libtpu: 0.0.40
codegen_flags: <defaults>
</compile_context>

<pallas_src>
import functools

import jax
import jax.numpy as jnp
from jax.experimental import pallas as pl
from jax.experimental.pallas import tpu as pltpu


def _round_up(x: int, m: int) -> int:
    return (x + m - 1) // m * m


def _cdiv(a: int, b: int) -> int:
    return (a + b - 1) // b


def _softplus(z):
    # numerically stable softplus == BCE-with-logits core
    return jnp.maximum(z, 0.0) + jnp.log1p(jnp.exp(-jnp.abs(z)))


def _daan_global_kernel(fs_ref, ft_ref, w1_ref, b1_ref, w2_ref, b2_ref,
                        out_ref, acc_ref, *,
                        n_rows, tile_b, tiles_per_shard, needs_mask):
    shard = pl.program_id(0)   # "parallel" axis (TensorCore shard)
    step = pl.program_id(1)    # "arbitrary" axis (carries the accumulator)

    @pl.when(step == 0)
    def _():
        acc_ref[...] = jnp.zeros_like(acc_ref)

    w1 = w1_ref[...]           # (H, H) bf16, resident (single VMEM copy)
    b1 = b1_ref[...]           # (1, H) f32
    w2 = w2_ref[...]           # (1, H) f32 (second layer as a row vector)
    b2 = b2_ref[0, 0]          # f32 scalar from SMEM

    def disc_logit(x_ref):
        # Layer 1 on the MXU: bf16 operands (cast in-kernel), f32 accumulation.
        h = jnp.dot(x_ref[...].astype(jnp.bfloat16), w1,
                    preferred_element_type=jnp.float32)
        h = jnp.maximum(h + b1, 0.0)                           # bias + ReLU (VPU, f32)
        # Layer 2 has output width 1 -> VPU multiply + lane reduce (keeps the MXU
        # free and avoids a degenerate 1-lane-wide matmul result tile).
        return jnp.sum(h * w2, axis=-1, keepdims=True) + b2    # (tile_b, 1) f32

    d_s = disc_logit(fs_ref)   # source logits
    d_t = disc_logit(ft_ref)   # target logits

    # source label 1 -> softplus(-d); target label 0 -> softplus(+d)
    contrib = _softplus(-d_s) + _softplus(d_t)                 # (tile_b, 1) f32

    if needs_mask:
        # Rows past the true per-domain batch (boundary tile / over-hanging shard
        # tiles whose block index was clamped in the index_map) contribute zero.
        g = shard * tiles_per_shard + step                     # unclamped tile index
        row = g * tile_b + jax.lax.broadcasted_iota(jnp.int32, (tile_b, 1), 0)
        contrib = jnp.where(row < n_rows, contrib, 0.0)

    acc_ref[...] += contrib                                    # VMEM vector accumulator

    @pl.when(step == pl.num_programs(1) - 1)
    def _():
        # One cross-sublane reduce per shard; lane-dense unmasked (8,128) store of
        # the shard partial sum (wrapper adds shards and scales by 1/(2B)).
        out_ref[...] = jnp.full(out_ref.shape, jnp.sum(acc_ref[...]),
                                dtype=out_ref.dtype)


def daan_global_loss(f_s, f_t, w1, b1, w2, b2, *,
                     max_tile_b=512, num_row_shards=1):
    """Pallas implementation of DAANLoss.forward (global adversarial loss).

    num_row_shards: set to 2 on v7x (2 TensorCores/chip) to split the row grid
    across cores via a leading "parallel" grid axis; leave at 1 on v5e/v6e.
    """
    B, H = f_s.shape
    assert f_t.shape == (B, H)

    # Row tile: as large as the VMEM budget allows (amortizes per-step overhead,
    # fills the 256-wide MXU on v6e/v7x); multiple of 16 for bf16 sublane packing.
    tile_b = _round_up(min(max_tile_b, _round_up(B, 16)), 16)
    num_tiles = _cdiv(B, tile_b)

    shards = max(1, min(int(num_row_shards), num_tiles))
    tiles_per_shard = _cdiv(num_tiles, shards)
    needs_mask = (shards * tiles_per_shard * tile_b) != B

    # Resident discriminator parameters: bf16 w1 for the MXU, f32 for bias / layer 2.
    w1_bf = w1.astype(jnp.bfloat16)
    b1_f32 = b1.reshape(1, H).astype(jnp.float32)
    w2_row = w2.reshape(1, H).astype(jnp.float32)     # (H,1) -> (1,H) row for VPU reduce
    b2_f32 = b2.reshape(1, 1).astype(jnp.float32)

    def feat_map(s, i):
        # Clamp so an over-hanging shard tile re-reads a valid block; its rows are
        # masked out in-kernel using the *unclamped* global tile index.
        return (jnp.minimum(s * tiles_per_shard + i, num_tiles - 1), 0)

    kernel = functools.partial(
        _daan_global_kernel,
        n_rows=B, tile_b=tile_b, tiles_per_shard=tiles_per_shard,
        needs_mask=needs_mask)

    # VMEM budget: resident weights (single buffer), double-buffered f32 feature
    # tiles, in-kernel bf16 casts, f32 hidden activations, accumulator, headroom.
    vmem_bytes = (
        H * H * 2                      # resident bf16 w1 (single buffer)
        + 2 * H * 4                    # b1 + w2 row (f32)
        + 2 * 2 * (tile_b * H * 4)     # f_s / f_t f32 tiles, double buffered
        + 2 * (tile_b * H * 2)         # in-kernel bf16 casts of both halves
        + 2 * (tile_b * H * 4)         # f32 hidden activations
        + tile_b * 4                   # (tile_b,1) f32 accumulator
        + shards * 8 * 128 * 4         # partial-sum output tiles
        + (4 << 20)                    # compiler temporaries / headroom
    )

    partials = pl.pallas_call(
        kernel,
        out_shape=jax.ShapeDtypeStruct((shards, 8, 128), jnp.float32),
        grid_spec=pltpu.PrefetchScalarGridSpec(
            num_scalar_prefetch=0,
            grid=(shards, tiles_per_shard),
            in_specs=[
                pl.BlockSpec((tile_b, H), feat_map),                   # f_s (streamed)
                pl.BlockSpec((tile_b, H), feat_map),                   # f_t (streamed)
                pl.BlockSpec(memory_space=pltpu.MemorySpace.VMEM),     # w1 (resident)
                pl.BlockSpec(memory_space=pltpu.MemorySpace.VMEM),     # b1 (resident)
                pl.BlockSpec(memory_space=pltpu.MemorySpace.VMEM),     # w2 row (resident)
                pl.BlockSpec((1, 1), lambda s, i: (0, 0),
                             memory_space=pltpu.MemorySpace.SMEM),     # b2 scalar
            ],
            out_specs=pl.BlockSpec((1, 8, 128), lambda s, i: (s, 0, 0)),
            scratch_shapes=[pltpu.VMEM((tile_b, 1), jnp.float32)],     # BCE accumulator
        ),
        compiler_params=pltpu.CompilerParams(
            dimension_semantics=("parallel", "arbitrary"),
            vmem_limit_bytes=int(min(max(vmem_bytes, 16 << 20), 120 << 20)),
        ),
    )(f_s, f_t, w1_bf, b1_f32, w2_row, b2_f32)

    # sum of shard partials / (2B) == 0.5 * (mean_source + mean_target), since
    # both domains contribute exactly B rows.
    return jnp.sum(partials[:, 0, 0]) * (1.0 / (2.0 * B))


def reference_loss(f_s, f_t, w1, b1, w2, b2):
    # Plain-JAX f32 reference following the PyTorch code path literally.
    f = jnp.concatenate([f_s, f_t], axis=0)                    # GRL fwd = identity
    h = jnp.maximum(f @ w1 + b1, 0.0)
    d = h @ w2 + b2
    d_s, d_t = jnp.split(d, 2, axis=0)
    sp = lambda z: jnp.maximum(z, 0.0) + jnp.log1p(jnp.exp(-jnp.abs(z)))
    return 0.5 * (jnp.mean(sp(-d_s)) + jnp.mean(sp(d_t)))


if __name__ == "__main__":
    key = jax.random.PRNGKey(0)
    k_fs, k_ft, k_w1, k_b1, k_w2, k_b2, k_fs2, k_ft2 = jax.random.split(key, 8)

    # ---- primary demo shape (small; matches the module's forward signature) ----
    B, H, num_class = 8, 32, 3
    f_s = jax.random.normal(k_fs, (B, H), dtype=jnp.float32)
    f_t = jax.random.normal(k_ft, (B, H), dtype=jnp.float32)
    source_logits = jax.random.normal(key, (B, num_class), dtype=jnp.float32)  # unused by forward
    target_logits = jax.random.normal(key, (B, num_class), dtype=jnp.float32)  # unused by forward

    # deterministic synthetic domain-discriminator parameters
    w1 = jax.random.normal(k_w1, (H, H), dtype=jnp.float32) * 0.1
    b1 = jax.random.normal(k_b1, (1, H), dtype=jnp.float32) * 0.1
    w2 = jax.random.normal(k_w2, (H, 1), dtype=jnp.float32) * 0.1
    b2 = jax.random.normal(k_b2, (1, 1), dtype=jnp.float32) * 0.1

    loss = daan_global_loss(f_s, f_t, w1, b1, w2, b2)
    jax.block_until_ready(loss)
    ref = reference_loss(f_s, f_t, w1, b1, w2, b2)
    # bf16 MXU operands -> relaxed tolerance vs. the pure-f32 reference
    assert jnp.allclose(loss, ref, rtol=2e-2, atol=2e-2), (loss, ref)

    # ---- second check: multi-step accumulation, boundary-row masking, and the
    #      2-way row-shard ("parallel") path used for v7x megacore ----
    B2 = 40
    f_s2 = jax.random.normal(k_fs2, (B2, H), dtype=jnp.float32)
    f_t2 = jax.random.normal(k_ft2, (B2, H), dtype=jnp.float32)
    loss2 = daan_global_loss(f_s2, f_t2, w1, b1, w2, b2,
                             max_tile_b=16, num_row_shards=2)
    jax.block_until_ready(loss2)
    ref2 = reference_loss(f_s2, f_t2, w1, b1, w2, b2)
    assert jnp.allclose(loss2, ref2, rtol=2e-2, atol=2e-2), (loss2, ref2)

    # TODO(synk): GRL gradient reversal (backward-only), get_local_adversarial_result,
    # and update_dynamic_factor are not invoked by DAANLoss.forward, so they are
    # intentionally not implemented here.
    print("KERNEL_OK")
</pallas_src>

<mosaic_0001>
module attributes {stable_mosaic.version = 11 : i64} {
  func.func @_daan_global_kernel(%arg0: i32, %arg1: i32, %arg2: memref<16x32xf32, #tpu.memory_space<vmem>>, %arg3: memref<16x32xf32, #tpu.memory_space<vmem>>, %arg4: memref<32x32xbf16, #tpu.memory_space<vmem>>, %arg5: memref<1x32xf32, #tpu.memory_space<vmem>>, %arg6: memref<1x32xf32, #tpu.memory_space<vmem>>, %arg7: memref<1x1xf32, #tpu.memory_space<smem>>, %arg8: memref<1x8x128xf32, #tpu.memory_space<vmem>>, %arg9: memref<16x1xf32, #tpu.memory_space<vmem>>) attributes {dimension_semantics = [#tpu.dimension_semantics<parallel>, #tpu.dimension_semantics<arbitrary>], iteration_bounds = array<i64: 1, 1>, scalar_prefetch = 0 : i64, scratch_operands = 1 : i64, tpu.core_type = #tpu.core_type<tc>, window_params = [{transform_indices = @transform_0, window_bounds = array<i64: 16, 32>}, {transform_indices = @transform_1, window_bounds = array<i64: 16, 32>}, {pipeline_mode = #tpu.pipeline_mode<synchronous>, transform_indices = @transform_2, window_bounds = array<i64: 32, 32>}, {pipeline_mode = #tpu.pipeline_mode<synchronous>, transform_indices = @transform_3, window_bounds = array<i64: 1, 32>}, {pipeline_mode = #tpu.pipeline_mode<synchronous>, transform_indices = @transform_4, window_bounds = array<i64: 1, 32>}, {transform_indices = @transform_5, window_bounds = array<i64: 1, 1>}, {transform_indices = @transform_6, window_bounds = array<i64: 1, 8, 128>}]} {
    %c0_i32 = arith.constant 0 : i32
    %0 = arith.cmpi eq, %arg1, %c0_i32 : i32
    %1 = arith.extui %0 : i1 to i32
    %c0_i32_0 = arith.constant 0 : i32
    %2 = arith.cmpi ne, %1, %c0_i32_0 : i32
    scf.if %2 {
      %cst_29 = arith.constant 0.000000e+00 : f32
      %68 = vector.broadcast %cst_29 : f32 to vector<16x1xf32>
      %c0_30 = arith.constant 0 : index
      %c0_31 = arith.constant 0 : index
      %69 = vector.load %arg9[%c0_30, %c0_31] : memref<16x1xf32, #tpu.memory_space<vmem>>, vector<16x1xf32>
      tpu.vector_store %arg9[%c0_30, %c0_31], %68 {strides = array<i32>} : memref<16x1xf32, #tpu.memory_space<vmem>>, vector<16x1xf32>,
    } else {
    }
    %c0 = arith.constant 0 : index
    %c0_1 = arith.constant 0 : index
    %3 = vector.load %arg4[%c0, %c0_1] : memref<32x32xbf16, #tpu.memory_space<vmem>>, vector<32x32xbf16>
    %c0_2 = arith.constant 0 : index
    %c0_3 = arith.constant 0 : index
    %4 = vector.load %arg5[%c0_2, %c0_3] : memref<1x32xf32, #tpu.memory_space<vmem>>, vector<1x32xf32>
    %c0_4 = arith.constant 0 : index
    %c0_5 = arith.constant 0 : index
    %5 = vector.load %arg6[%c0_4, %c0_5] : memref<1x32xf32, #tpu.memory_space<vmem>>, vector<1x32xf32>
    %c0_6 = arith.constant 0 : index
    %c0_7 = arith.constant 0 : index
    %6 = memref.load %arg7[%c0_6, %c0_7] : memref<1x1xf32, #tpu.memory_space<smem>>
    %c0_8 = arith.constant 0 : index
    %c0_9 = arith.constant 0 : index
    %7 = vector.load %arg2[%c0_8, %c0_9] : memref<16x32xf32, #tpu.memory_space<vmem>>, vector<16x32xf32>
    %8 = arith.truncf %7 : vector<16x32xf32> to vector<16x32xbf16>
    %cst = arith.constant dense<0.000000e+00> : vector<16x32xf32>
    %9 = tpu.matmul %8, %3, %cst {dimension_numbers = #tpu.dot_dimension_numbers<[1], [0], [0], [1], [0, 0, 1, 1], [], []>} : vector<16x32xbf16>, vector<32x32xbf16>, vector<16x32xf32> -> vector<16x32xf32>
    %10 = vector.broadcast %4 : vector<1x32xf32> to vector<16x32xf32>
    %11 = arith.addf %9, %10 : vector<16x32xf32>
    %cst_10 = arith.constant 0.000000e+00 : f32
    %12 = vector.broadcast %cst_10 : f32 to vector<16x32xf32>
    %13 = arith.maximumf %11, %12 : vector<16x32xf32>
    %14 = vector.broadcast %5 : vector<1x32xf32> to vector<16x32xf32>
    %15 = arith.mulf %13, %14 : vector<16x32xf32>
    %cst_11 = arith.constant dense<0.000000e+00> : vector<16xf32>
    %16 = vector.multi_reduction <add>, %15, %cst_11 [1] : vector<16x32xf32> to vector<16xf32>
    %17 = vector.shape_cast %16 : vector<16xf32> to vector<16x1xf32>
    %18 = vector.broadcast %6 : f32 to vector<16x1xf32>
    %19 = arith.addf %17, %18 : vector<16x1xf32>
    %c0_12 = arith.constant 0 : index
    %c0_13 = arith.constant 0 : index
    %20 = vector.load %arg3[%c0_12, %c0_13] : memref<16x32xf32, #tpu.memory_space<vmem>>, vector<16x32xf32>
    %21 = arith.truncf %20 : vector<16x32xf32> to vector<16x32xbf16>
    %cst_14 = arith.constant dense<0.000000e+00> : vector<16x32xf32>
    %22 = tpu.matmul %21, %3, %cst_14 {dimension_numbers = #tpu.dot_dimension_numbers<[1], [0], [0], [1], [0, 0, 1, 1], [], []>} : vector<16x32xbf16>, vector<32x32xbf16>, vector<16x32xf32> -> vector<16x32xf32>
    %23 = vector.broadcast %4 : vector<1x32xf32> to vector<16x32xf32>
    %24 = arith.addf %22, %23 : vector<16x32xf32>
    %cst_15 = arith.constant 0.000000e+00 : f32
    %25 = vector.broadcast %cst_15 : f32 to vector<16x32xf32>
    %26 = arith.maximumf %24, %25 : vector<16x32xf32>
    %27 = vector.broadcast %5 : vector<1x32xf32> to vector<16x32xf32>
    %28 = arith.mulf %26, %27 : vector<16x32xf32>
    %cst_16 = arith.constant dense<0.000000e+00> : vector<16xf32>
    %29 = vector.multi_reduction <add>, %28, %cst_16 [1] : vector<16x32xf32> to vector<16xf32>
    %30 = vector.shape_cast %29 : vector<16xf32> to vector<16x1xf32>
    %31 = vector.broadcast %6 : f32 to vector<16x1xf32>
    %32 = arith.addf %30, %31 : vector<16x1xf32>
    %cst_17 = arith.constant 0.000000e+00 : f32
    %33 = vector.broadcast %cst_17 : f32 to vector<16x1xf32>
    %34 = arith.subf %33, %19 : vector<16x1xf32>
    %cst_18 = arith.constant 0.000000e+00 : f32
    %35 = vector.broadcast %cst_18 : f32 to vector<16x1xf32>
    %36 = arith.maximumf %34, %35 : vector<16x1xf32>
    %37 = math.absf %34 : vector<16x1xf32>
    %cst_19 = arith.constant 0.000000e+00 : f32
    %38 = vector.broadcast %cst_19 : f32 to vector<16x1xf32>
    %39 = arith.subf %38, %37 : vector<16x1xf32>
    %40 = math.exp %39 : vector<16x1xf32>
    %41 = math.log1p %40 : vector<16x1xf32>
    %42 = arith.addf %36, %41 : vector<16x1xf32>
    %cst_20 = arith.constant 0.000000e+00 : f32
    %43 = vector.broadcast %cst_20 : f32 to vector<16x1xf32>
    %44 = arith.maximumf %32, %43 : vector<16x1xf32>
    %45 = math.absf %32 : vector<16x1xf32>
    %cst_21 = arith.constant 0.000000e+00 : f32
    %46 = vector.broadcast %cst_21 : f32 to vector<16x1xf32>
    %47 = arith.subf %46, %45 : vector<16x1xf32>
    %48 = math.exp %47 : vector<16x1xf32>
    %49 = math.log1p %48 : vector<16x1xf32>
    %50 = arith.addf %44, %49 : vector<16x1xf32>
    %51 = arith.addf %42, %50 : vector<16x1xf32>
    %c1_i32 = arith.constant 1 : i32
    %52 = arith.muli %arg0, %c1_i32 : i32
    %53 = arith.addi %52, %arg1 : i32
    %c16_i32 = arith.constant 16 : i32
    %54 = arith.muli %53, %c16_i32 : i32
    %55 = tpu.iota {dimensions = array<i32: 0>} : vector<16x1xi32>
    %56 = vector.broadcast %54 : i32 to vector<16x1xi32>
    %57 = arith.addi %56, %55 : vector<16x1xi32>
    %c8_i32 = arith.constant 8 : i32
    %58 = vector.broadcast %c8_i32 : i32 to vector<16x1xi32>
    %59 = arith.cmpi slt, %57, %58 : vector<16x1xi32>
    %cst_22 = arith.constant 0.000000e+00 : f32
    %60 = vector.broadcast %cst_22 : f32 to vector<16x1xf32>
    %61 = arith.select %59, %51, %60 : vector<16x1xi1>, vector<16x1xf32>
    %c0_23 = arith.constant 0 : index
    %c0_24 = arith.constant 0 : index
    %62 = vector.load %arg9[%c0_23, %c0_24] : memref<16x1xf32, #tpu.memory_space<vmem>>, vector<16x1xf32>
    %63 = arith.addf %62, %61 : vector<16x1xf32>
    %c0_25 = arith.constant 0 : index
    %c0_26 = arith.constant 0 : index
    %64 = vector.load %arg9[%c0_25, %c0_26] : memref<16x1xf32, #tpu.memory_space<vmem>>, vector<16x1xf32>
    tpu.vector_store %arg9[%c0_25, %c0_26], %63 {strides = array<i32>} : memref<16x1xf32, #tpu.memory_space<vmem>>, vector<16x1xf32>,
    %c0_i32_27 = arith.constant 0 : i32
    %65 = arith.cmpi eq, %arg1, %c0_i32_27 : i32
    %66 = arith.extui %65 : i1 to i32
    %c0_i32_28 = arith.constant 0 : i32
    %67 = arith.cmpi ne, %66, %c0_i32_28 : i32
    scf.if %67 {
      %c0_29 = arith.constant 0 : index
      %c0_30 = arith.constant 0 : index
      %68 = vector.load %arg9[%c0_29, %c0_30] : memref<16x1xf32, #tpu.memory_space<vmem>>, vector<16x1xf32>
      %69 = vector.shape_cast %68 : vector<16x1xf32> to vector<1x16x1xf32>
      %cst_31 = arith.constant dense<0.000000e+00> : vector<1xf32>
      %70 = vector.multi_reduction <add>, %69, %cst_31 [1, 2] : vector<1x16x1xf32> to vector<1xf32>
      %71 = vector.shape_cast %70 : vector<1xf32> to vector<1x1x1xf32>
      %72 = vector.extract %71[0, 0, 0] : f32 from vector<1x1x1xf32>
      %73 = vector.broadcast %72 : f32 to vector<1x8x128xf32>
      %c0_32 = arith.constant 0 : index
      %c0_33 = arith.constant 0 : index
      %c0_34 = arith.constant 0 : index
      %74 = vector.load %arg8[%c0_32, %c0_33, %c0_34] : memref<1x8x128xf32, #tpu.memory_space<vmem>>, vector<1x8x128xf32>
      tpu.vector_store %arg8[%c0_32, %c0_33, %c0_34], %73 {strides = array<i32>} : memref<1x8x128xf32, #tpu.memory_space<vmem>>, vector<1x8x128xf32>,
    } else {
    }
    return
  }
  func.func @transform_0(%arg0: i32, %arg1: i32) -> (i32, i32) {
    %c1_i32 = arith.constant 1 : i32
    %0 = arith.muli %arg0, %c1_i32 : i32
    %1 = arith.addi %0, %arg1 : i32
    %c0_i32 = arith.constant 0 : i32
    %2 = arith.minsi %1, %c0_i32 : i32
    %c0_i32_0 = arith.constant 0 : i32
    %c0_i32_1 = arith.constant 0 : i32
    return %2, %c0_i32_0 : i32, i32
  }
  func.func @transform_1(%arg0: i32, %arg1: i32) -> (i32, i32) {
    %c1_i32 = arith.constant 1 : i32
    %0 = arith.muli %arg0, %c1_i32 : i32
    %1 = arith.addi %0, %arg1 : i32
    %c0_i32 = arith.constant 0 : i32
    %2 = arith.minsi %1, %c0_i32 : i32
    %c0_i32_0 = arith.constant 0 : i32
    %c0_i32_1 = arith.constant 0 : i32
    return %2, %c0_i32_0 : i32, i32
  }
  func.func @transform_2(%arg0: i32, %arg1: i32) -> (i32, i32) {
    %c0_i32 = arith.constant 0 : i32
    %c0_i32_0 = arith.constant 0 : i32
    %c0_i32_1 = arith.constant 0 : i32
    return %c0_i32, %c0_i32_0 : i32, i32
  }
  func.func @transform_3(%arg0: i32, %arg1: i32) -> (i32, i32) {
    %c0_i32 = arith.constant 0 : i32
    %c0_i32_0 = arith.constant 0 : i32
    %c0_i32_1 = arith.constant 0 : i32
    return %c0_i32, %c0_i32_0 : i32, i32
  }
  func.func @transform_4(%arg0: i32, %arg1: i32) -> (i32, i32) {
    %c0_i32 = arith.constant 0 : i32
    %c0_i32_0 = arith.constant 0 : i32
    %c0_i32_1 = arith.constant 0 : i32
    return %c0_i32, %c0_i32_0 : i32, i32
  }
  func.func @transform_5(%arg0: i32, %arg1: i32) -> (i32, i32) {
    %c0_i32 = arith.constant 0 : i32
    %c0_i32_0 = arith.constant 0 : i32
    %c0_i32_1 = arith.constant 0 : i32
    return %c0_i32, %c0_i32_0 : i32, i32
  }
  func.func @transform_6(%arg0: i32, %arg1: i32) -> (i32, i32, i32) {
    %c0_i32 = arith.constant 0 : i32
    %c0_i32_0 = arith.constant 0 : i32
    %c0_i32_1 = arith.constant 0 : i32
    return %arg0, %c0_i32, %c0_i32_0 : i32, i32, i32
  }
}

</mosaic_0001>

<llo_original>
// kernel: tpu_custom_call.1
$region0: #{tpu_custom_call.1}
  #allocation0 [shape = 'u32[]', space=smem, size = 0x4, offset = 0x4, fixed_abs, tag = 'smem constant byte address 0x4 - core index']
  #allocation1 [shape = 'u32[144,128]{1,0:T(1,128)}', space=vmem, size = 0x12000, scoped, tag = 'internal scratch']
  #allocation2 [shape = 'f32[16,1]{1,0:T(8,128)}', space=vmem, size = 0x2000, scoped, tag = 'scratch operand']
  #allocation3 [shape = 'f32[1,1]{1,0:T(1,128)S(6)}', space=smem, size = 0x200, scoped, tag = 'scoped memory for tpu_custom_call.1']
  %s0 = inlined_call_operand.hbm [shape: f32[8,32], index: 0, kind: input, shape index: {}]
  %s1 = inlined_call_operand.hbm [shape: f32[8,32], index: 1, kind: input, shape index: {}]
  %s2 = inlined_call_operand.hbm [shape: bf16[32,32], index: 2, kind: input, shape index: {}]
  %s3 = inlined_call_operand.vmem [shape: f32[1,32], index: 3, kind: input, shape index: {}]
  %s4 = inlined_call_operand.vmem [shape: f32[1,32], index: 4, kind: input, shape index: {}]
  %s5 = inlined_call_operand.<no memory space> [shape: f32[1,1], index: 5, kind: input, shape index: {}]
  %s6 = inlined_call_operand.hbm [shape: f32[1,8,128], index: 6, kind: output, shape index: {}]
  %s7 = sld [smem:[#allocation0]]
  $region54: #{tpu_custom_call.1} parent=0
    _
  %s9 = ssub.s32 1, %s7
  %s10 = scalar_select 0, %s9, %s7
  %11 = sst [smem:[#allocation3]] %s5
  $region1: #{tpu_custom_call.1} parent=0
    #allocation4 [shape = 'u8[8192]{0}', space=vmem, size = 0x2000, scoped, tag = 'input window, operand 0, single buffered']
    #allocation5 [shape = 's32[1]{0}', space=sflag, size = 0x4, scoped, tag = 'scoped memory for tpu_custom_call.1']
    #allocation6 [shape = 's32[1]{0}', space=sflag, size = 0x4, scoped, tag = 'scoped memory for tpu_custom_call.1']
    #allocation7 [shape = 'u8[8192]{0}', space=vmem, size = 0x2000, scoped, tag = 'input window, operand 1, single buffered']
    #allocation8 [shape = 's32[1]{0}', space=sflag, size = 0x4, scoped, tag = 'scoped memory for tpu_custom_call.1']
    #allocation9 [shape = 'u8[8192]{0}', space=vmem, size = 0x2000, scoped, tag = 'input window, operand 2, single buffered']
    #allocation10 [shape = 'u8[4096]{0}', space=vmem, size = 0x1000, scoped, tag = 'output window, operand 0, single buffered']
    %12 = vsyncpa [#allocation5], 0
    %13 = vsyncpa [#allocation8], 0
    %14 = vsyncpa [#allocation6], 0
    // Predicated region
    $region2: #{tpu_custom_call.1} parent=1 // pred_check
      _
    $region3: #{tpu_custom_call.1} parent=1 // pred_check_branch
      %16 = sbr.rel (0) target = $region5
    $region4: #{tpu_custom_call.1} parent=1 // pred_region
      %s17 = sadd.s32 0, 0
      %p18 = scmp.lt.s32.totalorder %s17, 0
      %s19 = scalar_select %p18, %s17, 0
      %s20 = smul.u32 2, %s19
      %s21 = ssub.s32 1, %s20
      %s22 = smul.u32 128, %s21
      %s24 = ssub.s32 256, %s22
      %25 = vsyncadd [#allocation5], %s24
      %p26 = scmp.ne.s32.totalorder 0, %s22
      %s27 = smul.addr %s20, 128
      %s28 = scalar_lea.hbm %s0, %s27
      %s29 = smul.u32 8, %s21
      %s30 = sshll.u32 [#allocation4], 4
      %s31 = int_to_ptr.vmem [resolvable:$true] %s30
      %s32 = sshll.u32 %s29, 4
      %36 = dma.hbm_to_vmem [thread:$0]  (%p26), %s28, %s32, %s31, [#allocation5], 128, 128, 8
    $region5: #{tpu_custom_call.1} parent=1 // pred_fallthru
      _
    // Predicated region
    $region6: #{tpu_custom_call.1} parent=1 // pred_check
      _
    $region7: #{tpu_custom_call.1} parent=1 // pred_check_branch
      %38 = sbr.rel (0) target = $region9
    $region8: #{tpu_custom_call.1} parent=1 // pred_region
      %s39 = sadd.s32 0, 0
      %p40 = scmp.lt.s32.totalorder %s39, 0
      %s41 = scalar_select %p40, %s39, 0
      %s42 = smul.u32 2, %s41
      %s43 = ssub.s32 1, %s42
      %s44 = smul.u32 128, %s43
      %s46 = ssub.s32 256, %s44
      %47 = vsyncadd [#allocation8], %s46
      %p48 = scmp.ne.s32.totalorder 0, %s44
      %s49 = smul.addr %s42, 128
      %s50 = scalar_lea.hbm %s1, %s49
      %s51 = smul.u32 8, %s43
      %s52 = sshll.u32 [#allocation7], 4
      %s53 = int_to_ptr.vmem [resolvable:$true] %s52
      %s54 = sshll.u32 %s51, 4
      %58 = dma.hbm_to_vmem [thread:$0]  (%p48), %s50, %s54, %s53, [#allocation8], 128, 128, 8
    $region9: #{tpu_custom_call.1} parent=1 // pred_fallthru
      _
    // Predicated region
    $region10: #{tpu_custom_call.1} parent=1 // pred_check
      _
    $region11: #{tpu_custom_call.1} parent=1 // pred_check_branch
      %60 = sbr.rel (0) target = $region13
    $region12: #{tpu_custom_call.1} parent=1 // pred_region
      %s62 = ssub.s32 256, 256
      %63 = vsyncadd [#allocation8], %s62
      %s64 = sshll.u32 [#allocation9], 4
      %s65 = int_to_ptr.vmem [resolvable:$true] %s64
      %70 = dma.hbm_to_vmem [thread:$0]  %s2, 256, %s65, [#allocation8], 64, 64, 4
    $region13: #{tpu_custom_call.1} parent=1 // pred_fallthru
      _
    // Predicated region
    $region14: #{tpu_custom_call.1} parent=1 // pred_check
      _
    $region15: #{tpu_custom_call.1} parent=1 // pred_check_branch
      %72 = sbr.rel (0) target = $region17
    $region16: #{tpu_custom_call.1} parent=1 // pred_region
      _
    $region17: #{tpu_custom_call.1} parent=1 // pred_fallthru
      _
    // Predicated region
    $region18: #{tpu_custom_call.1} parent=1 // pred_check
      _
    $region19: #{tpu_custom_call.1} parent=1 // pred_check_branch
      %74 = sbr.rel (0) target = $region21
    $region20: #{tpu_custom_call.1} parent=1 // pred_region
      _
    $region21: #{tpu_custom_call.1} parent=1 // pred_fallthru
      _
    // Predicated region
    $region22: #{tpu_custom_call.1} parent=1 // pred_check
      _
    $region23: #{tpu_custom_call.1} parent=1 // pred_check_branch
      %76 = sbr.rel (0) target = $region25
    $region24: #{tpu_custom_call.1} parent=1 // pred_region
      _
    $region25: #{tpu_custom_call.1} parent=1 // pred_fallthru
      _
    // Predicated region
    $region26: #{tpu_custom_call.1} parent=1 // pred_check
      _
    $region27: #{tpu_custom_call.1} parent=1 // pred_check_branch
      %78 = sbr.rel (0) target = $region29
    $region28: #{tpu_custom_call.1} parent=1 // pred_region
      %79 = dma.done [#allocation5], 256
    $region29: #{tpu_custom_call.1} parent=1 // pred_fallthru
      _
    // Predicated region
    $region30: #{tpu_custom_call.1} parent=1 // pred_check
      _
    $region31: #{tpu_custom_call.1} parent=1 // pred_check_branch
      %81 = sbr.rel (0) target = $region33
    $region32: #{tpu_custom_call.1} parent=1 // pred_region
      %82 = dma.done [#allocation8], 256
    $region33: #{tpu_custom_call.1} parent=1 // pred_fallthru
      _
    // Predicated region
    $region34: #{tpu_custom_call.1} parent=1 // pred_check
      _
    $region35: #{tpu_custom_call.1} parent=1 // pred_check_branch
      %84 = sbr.rel (0) target = $region37
    $region36: #{tpu_custom_call.1} parent=1 // pred_region
      %85 = dma.done [#allocation8], 256
    $region37: #{tpu_custom_call.1} parent=1 // pred_fallthru
      _
    %s86 = sadd.s32 0, 0
    %p87 = scmp.lt.s32.totalorder %s86, 0
    %s88 = scalar_select %p87, %s86, 0
    %s89 = smul.u32 2, %s88
    %s90 = ssub.s32 1, %s89
    %s91 = smul.u32 128, %s90
    %s92 = sadd.s32 0, 0
    %p93 = scmp.lt.s32.totalorder %s92, 0
    %s94 = scalar_select %p93, %s92, 0
    %s95 = smul.u32 2, %s94
    %s96 = ssub.s32 1, %s95
    %s97 = smul.u32 128, %s96
    %p99 = scmp.eq.s32.totalorder 0, 0
    // Predicated region
    $region38: #{tpu_custom_call.1} parent=1 // pred_check
      %p100 = pneg %p99
    $region39: #{tpu_custom_call.1} parent=1 // pred_check_branch
      %102 = sbr.rel (%p100) target = $region41
    $region40: #{tpu_custom_call.1} parent=1 // pred_region
      %vm103 = vcmask 7168
      %104 = vst.msk [vmem:[#allocation2] sm:$0xff] %vm103, 0.0
      %105 = vst.msk [vmem:[#allocation2 + $0x8] sm:$0xff] %vm103, 0.0
    $region41: #{tpu_custom_call.1} parent=1 // pred_fallthru
      _
    %v106 = vld [vmem:[#allocation9] sm:$0xf]
    %v107 = vld [vmem:[#allocation9 + $0x4] sm:$0xf]
    %v108 = vld [vmem:[#allocation9 + $0x8] sm:$0xf]
    %v109 = vld [vmem:[#allocation9 + $0xc] sm:$0xf]
    %v110 = vld [vmem:[%s3] sm:$0x1]
    %v111 = vld [vmem:[%s4] sm:$0x1]
    %s112 = sld [smem:[#allocation3]]
    %v113 = vld [vmem:[#allocation4] sm:$0xff]
    %v114 = vld [vmem:[#allocation4 + $0x8] sm:$0xff]
    %v115 = vpack.c.bf16 %v114, %v113
    %v117 = vlaneseq
    %v118 = vshrl.u32 %v117, 7
    %v119 = vsub.s32 0, %v118
    %v120 = vrot.slane %v110, %v119
    %v126 = vunpack.c.l.b16 %v106
    %v127 = vunpack.c.l.b16 %v107
    %v128 = vunpack.c.l.b16 %v108
    %v129 = vunpack.c.l.b16 %v109
    %v130 = vpack.c.b16 %v127, %v126
    %v131 = vpack.c.b16 %v129, %v128
    %vm134 = vcmask 261120
    %v136 = vsel %vm134, %v115, 0
    %138 = vmatprep.subr.bf16.mxu0 0
    %139 = vmatpush1.bf16.msra.mxu0 %v130
    %140 = vmatprep.subr.bf16.mxu0 0
    %141 = vmatpush1.bf16.msra.mxu0 %v131
    %142 = vmatprep.subr.bf16.mxu0 0
    %143 = vmatpush1.bf16.msra.mxu0 0
    %144 = vmatprep.subr.bf16.mxu0 0
    %145 = vmatpush1.bf16.msra.mxu0 0
    %146 = vmatprep.subr.bf16.mxu0 0
    %147 = vmatpush1.bf16.msra.mxu0 0
    %148 = vmatprep.subr.bf16.mxu0 0
    %149 = vmatpush1.bf16.msra.mxu0 0
    %150 = vmatprep.subr.bf16.mxu0 0
    %151 = vmatpush1.bf16.msra.mxu0 0
    %152 = vmatprep.subr.bf16.mxu0 0
    %153 = vmatpush1.bf16.msra.mxu0 0
    %154 = vmatprep.subr.bf16.mxu0 0
    %155 = vmatpush1.bf16.msra.mxu0 0
    %156 = vmatprep.subr.bf16.mxu0 0
    %157 = vmatpush1.bf16.msra.mxu0 0
    %158 = vmatprep.subr.bf16.mxu0 0
    %159 = vmatpush1.bf16.msra.mxu0 0
    %160 = vmatprep.subr.bf16.mxu0 0
    %161 = vmatpush1.bf16.msra.mxu0 0
    %162 = vmatprep.subr.bf16.mxu0 0
    %163 = vmatpush1.bf16.msra.mxu0 0
    %164 = vmatprep.subr.bf16.mxu0 0
    %165 = vmatpush1.bf16.msra.mxu0 0
    %166 = vmatprep.subr.bf16.mxu0 0
    %167 = vmatpush1.bf16.msra.mxu0 0
    %168 = vmatprep.subr.bf16.mxu0 0
    %169 = vmatpush1.bf16.msra.mxu0 0
    %170 = vmatprep.mubr.bf16.mxu0 0
    %171 = vmatmul.mubr.bf16.gmra.mrb[0].mxu0 %v136
    %v172 = vpop.f32.mrb[0].mxu0
    %v173 = vadd.f32 %v120, %v172
    %v174 = vpop.f32.mrb[0].mxu0
    %v175 = vpop.f32.mrb[0].mxu0
    %v176 = vadd.f32 %v120, %v175
    %v177 = vpop.f32.mrb[0].mxu0
    %178 = vdwg.mxu0
    %v179 = vmax.f32 %v173, 0.0
    %v180 = vmax.f32 %v176, 0.0
    %v182 = vlaneseq
    %v183 = vshrl.u32 %v182, 7
    %v184 = vsub.s32 0, %v183
    %v185 = vrot.slane %v111, %v184
    %v187 = vmul.f32 %v179, %v185
    %v188 = vmul.f32 %v180, %v185
    %v189 = vsel %vm134, %v187, 0.0
    %190 = vadd.xlane.f32.xlu0 %v189
    %v191 = vpop.xlane.xlu0 %190
    %v192 = vsel %vm134, %v188, 0.0
    %193 = vadd.xlane.f32.xlu0 %v192
    %v194 = vpop.xlane.xlu0 %193
    %v195 = vstv %s112
    %v196 = vadd.f32 %v191, %v195
    %v197 = vadd.f32 %v194, %v195
    %v198 = vld [vmem:[#allocation7] sm:$0xff]
    %v199 = vld [vmem:[#allocation7 + $0x8] sm:$0xff]
    %v200 = vpack.c.bf16 %v199, %v198
    %v202 = vsel %vm134, %v200, 0
    %204 = vmatprep.subr.bf16.mxu0 0
    %205 = vmatpush1.bf16.msra.mxu0 %v130
    %206 = vmatprep.subr.bf16.mxu0 0
    %207 = vmatpush1.bf16.msra.mxu0 %v131
    %208 = vmatprep.subr.bf16.mxu0 0
    %209 = vmatpush1.bf16.msra.mxu0 0
    %210 = vmatprep.subr.bf16.mxu0 0
    %211 = vmatpush1.bf16.msra.mxu0 0
    %212 = vmatprep.subr.bf16.mxu0 0
    %213 = vmatpush1.bf16.msra.mxu0 0
    %214 = vmatprep.subr.bf16.mxu0 0
    %215 = vmatpush1.bf16.msra.mxu0 0
    %216 = vmatprep.subr.bf16.mxu0 0
    %217 = vmatpush1.bf16.msra.mxu0 0
    %218 = vmatprep.subr.bf16.mxu0 0
    %219 = vmatpush1.bf16.msra.mxu0 0
    %220 = vmatprep.subr.bf16.mxu0 0
    %221 = vmatpush1.bf16.msra.mxu0 0
    %222 = vmatprep.subr.bf16.mxu0 0
    %223 = vmatpush1.bf16.msra.mxu0 0
    %224 = vmatprep.subr.bf16.mxu0 0
    %225 = vmatpush1.bf16.msra.mxu0 0
    %226 = vmatprep.subr.bf16.mxu0 0
    %227 = vmatpush1.bf16.msra.mxu0 0
    %228 = vmatprep.subr.bf16.mxu0 0
    %229 = vmatpush1.bf16.msra.mxu0 0
    %230 = vmatprep.subr.bf16.mxu0 0
    %231 = vmatpush1.bf16.msra.mxu0 0
    %232 = vmatprep.subr.bf16.mxu0 0
    %233 = vmatpush1.bf16.msra.mxu0 0
    %234 = vmatprep.subr.bf16.mxu0 0
    %235 = vmatpush1.bf16.msra.mxu0 0
    %236 = vmatprep.mubr.bf16.mxu0 0
    %237 = vmatmul.mubr.bf16.gmra.mrb[0].mxu0 %v202
    %v238 = vpop.f32.mrb[0].mxu0
    %v239 = vadd.f32 %v120, %v238
    %v240 = vpop.f32.mrb[0].mxu0
    %v241 = vpop.f32.mrb[0].mxu0
    %v242 = vadd.f32 %v120, %v241
    %v243 = vpop.f32.mrb[0].mxu0
    %244 = vdwg.mxu0
    %v245 = vmax.f32 %v239, 0.0
    %v246 = vmax.f32 %v242, 0.0
    %v247 = vmul.f32 %v245, %v185
    %v248 = vmul.f32 %v246, %v185
    %v249 = vsel %vm134, %v247, 0.0
    %250 = vadd.xlane.f32.xlu0 %v249
    %v251 = vpop.xlane.xlu0 %250
    %v252 = vsel %vm134, %v248, 0.0
    %253 = vadd.xlane.f32.xlu0 %v252
    %v254 = vpop.xlane.xlu0 %253
    %v255 = vadd.f32 %v251, %v195
    %v256 = vadd.f32 %v254, %v195
    %v257 = vsub.f32 0.0, %v196
    %v258 = vsub.f32 0.0, %v197
    %v259 = vmax.f32 %v257, 0.0
    %v260 = vmax.f32 %v258, 0.0
    %v261 = vand.u32 2147483647, %v257
    %v262 = vand.u32 2147483647, %v258
    %v263 = vsub.f32 0.0, %v261
    %v264 = vsub.f32 0.0, %v262
    %v265 = vmul.f32 %v263, 1.442695
    %v266 = vpow.pop %v265
    %v267 = vmul.f32 %v264, 1.442695
    %v268 = vpow.pop %v267
    %v269 = vadd.f32 %v266, 1.0
    %v270 = vlog2.pop %v269
    %v271 = vmul.f32 %v270, 0.6931472
    %v272 = vmul.f32 -0.5, %v266
    %v273 = vadd.f32 %v272, 1.0
    %v274 = vmul.f32 %v273, %v266
    %v275 = vand.u32 2147483647, %v266
    %vm276 = vcmp.lt.f32.partialorder %v275, 0.0004427343
    %v277 = vsel %vm276, %v274, %v271
    %v278 = vadd.f32 %v268, 1.0
    %v279 = vlog2.pop %v278
    %v280 = vmul.f32 %v279, 0.6931472
    %v281 = vmul.f32 -0.5, %v268
    %v282 = vadd.f32 %v281, 1.0
    %v283 = vmul.f32 %v282, %v268
    %v284 = vand.u32 2147483647, %v268
    %vm285 = vcmp.lt.f32.partialorder %v284, 0.0004427343
    %v286 = vsel %vm285, %v283, %v280
    %v287 = vadd.f32 %v259, %v277
    %v288 = vadd.f32 %v260, %v286
    %v289 = vmax.f32 %v255, 0.0
    %v290 = vmax.f32 %v256, 0.0
    %v291 = vand.u32 2147483647, %v255
    %v292 = vand.u32 2147483647, %v256
    %v293 = vsub.f32 0.0, %v291
    %v294 = vsub.f32 0.0, %v292
    %v295 = vmul.f32 %v293, 1.442695
    %v296 = vpow.pop %v295
    %v297 = vmul.f32 %v294, 1.442695
    %v298 = vpow.pop %v297
    %v299 = vadd.f32 %v296, 1.0
    %v300 = vlog2.pop %v299
    %v301 = vmul.f32 %v300, 0.6931472
    %v302 = vmul.f32 -0.5, %v296
    %v303 = vadd.f32 %v302, 1.0
    %v304 = vmul.f32 %v303, %v296
    %v305 = vand.u32 2147483647, %v296
    %vm306 = vcmp.lt.f32.partialorder %v305, 0.0004427343
    %v307 = vsel %vm306, %v304, %v301
    %v308 = vadd.f32 %v298, 1.0
    %v309 = vlog2.pop %v308
    %v310 = vmul.f32 %v309, 0.6931472
    %v311 = vmul.f32 -0.5, %v298
    %v312 = vadd.f32 %v311, 1.0
    %v313 = vmul.f32 %v312, %v298
    %v314 = vand.u32 2147483647, %v298
    %vm315 = vcmp.lt.f32.partialorder %v314, 0.0004427343
    %v316 = vsel %vm315, %v313, %v310
    %v317 = vadd.f32 %v289, %v307
    %v318 = vadd.f32 %v290, %v316
    %v319 = vadd.f32 %v287, %v317
    %v320 = vadd.f32 %v288, %v318
    %s321 = sadd.s32 0, 0
    %s322 = smul.u32 %s321, 16
    %v323 = vlaneseq
    %v324 = vshrl.u32 %v323, 7
    %v325 = vadd.s32 %v324, 8
    %v326 = vstv %s322
    %v327 = vadd.s32 %v326, %v324
    %v328 = vadd.s32 %v326, %v325
    %vm329 = vcmp.lt.s32.totalorder %v327, 8
    %vm330 = vcmp.lt.s32.totalorder %v328, 8
    %v331 = vsel %vm329, %v319, 0.0
    %v332 = vsel %vm330, %v320, 0.0
    %v333 = vld [vmem:[#allocation2] sm:$0xff]
    %v334 = vld [vmem:[#allocation2 + $0x8] sm:$0xff]
    %v335 = vadd.f32 %v333, %v331
    %v336 = vadd.f32 %v334, %v332
    %vm337 = vcmask 7168
    %338 = vst.msk [vmem:[#allocation2] sm:$0xff] %vm337, %v335
    %339 = vst.msk [vmem:[#allocation2 + $0x8] sm:$0xff] %vm337, %v336
    // Predicated region
    $region42: #{tpu_custom_call.1} parent=1 // pred_check
      %p340 = pneg %p99
    $region43: #{tpu_custom_call.1} parent=1 // pred_check_branch
      %342 = sbr.rel (%p340) target = $region45
    $region44: #{tpu_custom_call.1} parent=1 // pred_region
      %v343 = vld [vmem:[#allocation2] sm:$0xff]
      %v344 = vld [vmem:[#allocation2 + $0x8] sm:$0xff]
      %v345 = vsel %vm337, %v343, 0.0
      %v346 = vsel %vm337, %v344, 0.0
      %v347 = vadd.f32 %v345, %v346
      %348 = vadd.xlane.f32.xlu0 %v347
      %v349 = vpop.xlane.xlu0 %348
      %v350 = vrot.slane %v349, 4
      %v351 = vadd.f32 %v349, %v350
      %v352 = vrot.slane %v351, 2
      %v353 = vadd.f32 %v351, %v352
      %v354 = vrot.slane %v353, 1
      %v355 = vadd.f32 %v353, %v354
      %s356 = vtos %v355
      %v357 = vstv %s356
      %358 = vst [vmem:[#allocation10] sm:$0xff] %v357
    $region45: #{tpu_custom_call.1} parent=1 // pred_fallthru
      _
    // Predicated region
    $region46: #{tpu_custom_call.1} parent=1 // pred_check
      _
    $region47: #{tpu_custom_call.1} parent=1 // pred_check_branch
      %360 = sbr.rel (0) target = $region49
    $region48: #{tpu_custom_call.1} parent=1 // pred_region
      %s362 = ssub.s32 128, 128
      %363 = vsyncadd [#allocation6], %s362
      %s365 = sshll.u32 [#allocation10], 4
      %s366 = int_to_ptr.vmem [resolvable:$true] %s365
      %368 = dma.vmem_to_hbm [thread:$0]  %s366, 128, %s6, [#allocation6]
    $region49: #{tpu_custom_call.1} parent=1 // pred_fallthru
      _
    // Predicated region
    $region50: #{tpu_custom_call.1} parent=1 // pred_check
      _
    $region51: #{tpu_custom_call.1} parent=1 // pred_check_branch
      %370 = sbr.rel (0) target = $region53
    $region52: #{tpu_custom_call.1} parent=1 // pred_region
      %371 = dma.done [#allocation6], 128
    $region53: #{tpu_custom_call.1} parent=1 // pred_fallthru
      _
    %372 = vsyncpa [#allocation5], 1
    %373 = vsyncpa [#allocation8], 1
    %374 = vsyncpa [#allocation6], 1

</llo_original>
